<compile_context>
chip_gen: v7x
topology: tpu7x:2x2x1
jax: 0.10.0
libtpu: 0.0.40
codegen_flags: <defaults>
</compile_context>

<pallas_src>
import functools

import jax
import jax.numpy as jnp
from jax.experimental import pallas as pl
from jax.experimental.pallas import tpu as pltpu


def _round_up(x, m):
    return (x + m - 1) // m * m


def _default_tq():
    """q-tile rows: 128 on v5e (128-wide MXU / small scoped VMEM), 256 on v6e/v7x."""
    try:
        kind = jax.devices()[0].device_kind.lower()
        if "v5e" in kind or "v5 lite" in kind or "v5lite" in kind:
            return 128
    except Exception:
        pass
    return 256


def _fused_causal_attn_kernel(xq_ref, xf_ref, w_ref, o_ref, k_sc, v_sc, *,
                              scale, tq, d_pad):
    # xq_ref: (1, tq, d_in) bf16      -- q tile of x
    # xf_ref: (1, T_pad, d_in) bf16   -- full x for this batch element (for K/V)
    # w_ref : (d_in, 3*d_pad) bf16    -- packed [Wq | Wk | Wv], resident
    # o_ref : (1, tq, d_pad)          -- output tile
    # k_sc/v_sc: (T_pad, d_pad) bf16 VMEM scratch (persist across q tiles)
    qi = pl.program_id(1)

    # ---- K/V projection for this batch element: exactly once, at the first q tile ----
    @pl.when(qi == 0)
    def _project_kv():
        xf = xf_ref[0]                                        # (T_pad, d_in)
        wk = w_ref[:, d_pad:2 * d_pad]
        wv = w_ref[:, 2 * d_pad:]
        k_sc[...] = jnp.dot(xf, wk, preferred_element_type=jnp.float32).astype(k_sc.dtype)
        v_sc[...] = jnp.dot(xf, wv, preferred_element_type=jnp.float32).astype(v_sc.dtype)

    # ---- Q projection for this tile; fold 1/sqrt(d_k) in f32, then bf16 for the MXU ----
    q = jnp.dot(xq_ref[0], w_ref[:, :d_pad],
                preferred_element_type=jnp.float32) * scale   # (tq, d_pad) f32
    q_bf = q.astype(jnp.bfloat16)

    def _scores(k_chunk):
        # q @ k_chunk^T without materializing a transpose (contract last dims).
        return jax.lax.dot_general(q_bf, k_chunk,
                                   dimension_numbers=(((1,), (1,)), ((), ())),
                                   preferred_element_type=jnp.float32)

    # ---- online softmax over fully-unmasked kv chunks j = 0 .. qi-1 (causal skip) ----
    def body(j, carry):
        m, l, acc = carry
        off = pl.multiple_of(j * tq, tq)
        k_c = k_sc[pl.ds(off, tq), :]
        v_c = v_sc[pl.ds(off, tq), :]
        s = _scores(k_c)                                      # (tq, tq) f32
        m_new = jnp.maximum(m, jnp.max(s, axis=-1, keepdims=True))
        a = jnp.exp(m - m_new)
        p = jnp.exp(s - m_new)
        l = a * l + jnp.sum(p, axis=-1, keepdims=True)
        acc = a * acc + jnp.dot(p.astype(jnp.bfloat16), v_c,
                                preferred_element_type=jnp.float32)
        return m_new, l, acc

    m0 = jnp.full((tq, 1), -jnp.inf, dtype=jnp.float32)
    l0 = jnp.zeros((tq, 1), dtype=jnp.float32)
    a0 = jnp.zeros((tq, d_pad), dtype=jnp.float32)
    m, l, acc = jax.lax.fori_loop(0, qi, body, (m0, l0, a0))

    # ---- diagonal chunk j == qi: the only place the causal mask is applied ----
    off = pl.multiple_of(qi * tq, tq)
    k_d = k_sc[pl.ds(off, tq), :]
    v_d = v_sc[pl.ds(off, tq), :]
    s = _scores(k_d)                                          # (tq, tq) f32
    row = jax.lax.broadcasted_iota(jnp.int32, s.shape, 0)
    col = jax.lax.broadcasted_iota(jnp.int32, s.shape, 1)
    s = jnp.where(col > row, jnp.float32(-1e30), s)           # finite mask: padding-safe
    m_new = jnp.maximum(m, jnp.max(s, axis=-1, keepdims=True))
    a = jnp.exp(m - m_new)
    p = jnp.exp(s - m_new)
    l = a * l + jnp.sum(p, axis=-1, keepdims=True)
    acc = a * acc + jnp.dot(p.astype(jnp.bfloat16), v_d,
                            preferred_element_type=jnp.float32)

    # TODO(synk): nn.Dropout on the attention weights is identity in eval mode;
    # training-mode dropout (pltpu.prng_seed + stateful_bernoulli) intentionally omitted.

    o_ref[0] = (acc * pl.reciprocal(l, approx=True)).astype(o_ref.dtype)


def causal_attention_v2(x, w_query, w_key, w_value):
    """Forward pass of CausalAttention_v2 (eval mode).

    x:                     (b, T, d_in) float32
    w_query/w_key/w_value: PyTorch-layout Linear weights, shape (d_out, d_in).
    Returns:               (b, T, d_out) float32
    """
    b, T, d_in = x.shape
    d_out = w_query.shape[0]
    out_dtype = x.dtype

    d_pad = _round_up(d_out, 128)                    # lane-dense head dim
    tq = min(_default_tq(), _round_up(T, 16))        # multiple of 16 (bf16 sublane tile)
    T_pad = _round_up(T, tq)

    # ---- glue: pad T with zero rows; bf16 activations; pack / pad / bf16 weights ----
    x_p = jnp.pad(x, ((0, 0), (0, T_pad - T), (0, 0))).astype(jnp.bfloat16)

    def _prep_w(w):  # (d_out, d_in) -> (d_in, d_pad), zero-padded columns, bf16
        return jnp.pad(w.T, ((0, 0), (0, d_pad - d_out))).astype(jnp.bfloat16)

    w_all = jnp.concatenate(
        [_prep_w(w_query), _prep_w(w_key), _prep_w(w_value)], axis=1)  # (d_in, 3*d_pad)

    scale = 1.0 / float(d_out) ** 0.5                # original d_out, not padded

    # Explicit VMEM budget (v5e default scoped limit is only 16 MiB; v7x physical 64 MiB):
    # double-buffered input/output blocks + bf16 K/V scratch + f32 softmax temporaries.
    vmem_bytes = (
        2 * tq * d_in * 2                 # x q-tile blocks (bf16)
        + 2 * T_pad * d_in * 2            # x full blocks (bf16)
        + 2 * d_in * 3 * d_pad * 2        # packed weight blocks (bf16)
        + 2 * tq * d_pad * 4              # output blocks (f32)
        + 2 * T_pad * d_pad * 2           # K + V scratch (bf16)
        + 6 * tq * tq * 4                 # score / exp temporaries (f32)
        + 6 * tq * d_pad * 4              # q / acc temporaries (f32)
        + (8 << 20)                       # compiler headroom
    )

    out = pl.pallas_call(
        functools.partial(_fused_causal_attn_kernel,
                          scale=scale, tq=tq, d_pad=d_pad),
        out_shape=jax.ShapeDtypeStruct((b, T_pad, d_pad), out_dtype),
        grid_spec=pltpu.PrefetchScalarGridSpec(
            num_scalar_prefetch=0,
            grid=(b, T_pad // tq),
            in_specs=[
                pl.BlockSpec((1, tq, d_in), lambda bi, qi: (bi, qi, 0)),     # x q tile
                pl.BlockSpec((1, T_pad, d_in), lambda bi, qi: (bi, 0, 0)),   # x full (K/V)
                pl.BlockSpec((d_in, 3 * d_pad), lambda bi, qi: (0, 0)),      # weights resident
            ],
            out_specs=pl.BlockSpec((1, tq, d_pad), lambda bi, qi: (bi, qi, 0)),
            scratch_shapes=[
                pltpu.VMEM((T_pad, d_pad), jnp.bfloat16),   # K scratch
                pltpu.VMEM((T_pad, d_pad), jnp.bfloat16),   # V scratch
            ],
        ),
        # Batch axis parallel (megacore shards batches; each core keeps its own K/V
        # scratch resident); q-tile axis sequential because K/V are built at qi == 0.
        compiler_params=pltpu.CompilerParams(
            dimension_semantics=("parallel", "arbitrary"),
            vmem_limit_bytes=min(int(vmem_bytes), 64 * 1024 * 1024),
        ),
        # TODO(synk): for very long context (K/V scratch approaching the VMEM budget)
        # switch the scratch to chunked HBM K/V with manual double-buffered DMA.
    )(x_p, x_p, w_all)

    return out[:, :T, :d_out]


def _reference(x, w_query, w_key, w_value):
    """Pure-JAX f32 reference mirroring the PyTorch forward (eval mode)."""
    q = x @ w_query.T
    k = x @ w_key.T
    v = x @ w_value.T
    scores = jnp.einsum("btd,bsd->bts", q, k)
    T = x.shape[1]
    mask = jnp.triu(jnp.ones((T, T), dtype=bool), k=1)
    scores = jnp.where(mask[None], -jnp.inf, scores)
    w = jax.nn.softmax(scores / jnp.sqrt(jnp.float32(k.shape[-1])), axis=-1)
    return jnp.einsum("bts,bsd->btd", w, v)


if __name__ == "__main__":
    # Shapes consistent with the module's forward:
    # batch=2, num_tokens=8 (== context_length), d_in=32, d_out=16
    b, T, d_in, d_out = 2, 8, 32, 16

    key = jax.random.PRNGKey(0)
    kx, kq, kk, kv = jax.random.split(key, 4)

    x = jax.random.normal(kx, (b, T, d_in), dtype=jnp.float32)
    # deterministic "Linear" weights (PyTorch layout: (d_out, d_in), no bias)
    w_query = jax.random.normal(kq, (d_out, d_in), dtype=jnp.float32) * 0.1
    w_key = jax.random.normal(kk, (d_out, d_in), dtype=jnp.float32) * 0.1
    w_value = jax.random.normal(kv, (d_out, d_in), dtype=jnp.float32) * 0.1

    attn = jax.jit(causal_attention_v2)
    out = jax.block_until_ready(attn(x, w_query, w_key, w_value))

    ref = _reference(x, w_query, w_key, w_value)
    assert out.shape == (b, T, d_out)
    # bf16 MXU operands (f32 accumulation) + approx reciprocal => relaxed tolerance
    assert jnp.allclose(out, ref, atol=2e-2, rtol=2e-2), "mismatch vs reference"

    print("KERNEL_OK")
</pallas_src>

<mosaic_0001>
module attributes {stable_mosaic.version = 11 : i64} {
  func.func @_fused_causal_attn_kernel(%arg0: i32, %arg1: i32, %arg2: memref<1x16x32xbf16, #tpu.memory_space<vmem>>, %arg3: memref<1x16x32xbf16, #tpu.memory_space<vmem>>, %arg4: memref<32x384xbf16, #tpu.memory_space<vmem>>, %arg5: memref<1x16x128xf32, #tpu.memory_space<vmem>>, %arg6: memref<16x128xbf16, #tpu.memory_space<vmem>>, %arg7: memref<16x128xbf16, #tpu.memory_space<vmem>>) attributes {dimension_semantics = [#tpu.dimension_semantics<parallel>, #tpu.dimension_semantics<arbitrary>], iteration_bounds = array<i64: 2, 1>, scalar_prefetch = 0 : i64, scratch_operands = 2 : i64, tpu.core_type = #tpu.core_type<tc>, window_params = [{transform_indices = @transform_0, window_bounds = array<i64: 1, 16, 32>}, {transform_indices = @transform_1, window_bounds = array<i64: 1, 16, 32>}, {pipeline_mode = #tpu.pipeline_mode<synchronous>, transform_indices = @transform_2, window_bounds = array<i64: 32, 384>}, {transform_indices = @transform_3, window_bounds = array<i64: 1, 16, 128>}]} {
    %c0_i32 = arith.constant 0 : i32
    %0 = arith.cmpi eq, %arg1, %c0_i32 : i32
    %1 = arith.extui %0 : i1 to i32
    %c0_i32_0 = arith.constant 0 : i32
    %2 = arith.cmpi ne, %1, %c0_i32_0 : i32
    scf.if %2 {
      %c0_20 = arith.constant 0 : index
      %c0_21 = arith.constant 0 : index
      %c0_22 = arith.constant 0 : index
      %51 = vector.load %arg3[%c0_20, %c0_21, %c0_22] : memref<1x16x32xbf16, #tpu.memory_space<vmem>>, vector<1x16x32xbf16>
      %52 = vector.shape_cast %51 : vector<1x16x32xbf16> to vector<16x32xbf16>
      %c0_23 = arith.constant 0 : index
      %c128 = arith.constant 128 : index
      %53 = vector.load %arg4[%c0_23, %c128] : memref<32x384xbf16, #tpu.memory_space<vmem>>, vector<32x128xbf16>
      %c0_24 = arith.constant 0 : index
      %c256 = arith.constant 256 : index
      %54 = vector.load %arg4[%c0_24, %c256] : memref<32x384xbf16, #tpu.memory_space<vmem>>, vector<32x128xbf16>
      %cst_25 = arith.constant dense<0.000000e+00> : vector<16x128xf32>
      %55 = tpu.matmul %52, %53, %cst_25 {dimension_numbers = #tpu.dot_dimension_numbers<[1], [0], [0], [1], [0, 0, 1, 1], [], []>} : vector<16x32xbf16>, vector<32x128xbf16>, vector<16x128xf32> -> vector<16x128xf32>
      %56 = arith.truncf %55 : vector<16x128xf32> to vector<16x128xbf16>
      %c0_26 = arith.constant 0 : index
      %c0_27 = arith.constant 0 : index
      %57 = vector.load %arg6[%c0_26, %c0_27] : memref<16x128xbf16, #tpu.memory_space<vmem>>, vector<16x128xbf16>
      tpu.vector_store %arg6[%c0_26, %c0_27], %56 {strides = array<i32>} : memref<16x128xbf16, #tpu.memory_space<vmem>>, vector<16x128xbf16>,
      %cst_28 = arith.constant dense<0.000000e+00> : vector<16x128xf32>
      %58 = tpu.matmul %52, %54, %cst_28 {dimension_numbers = #tpu.dot_dimension_numbers<[1], [0], [0], [1], [0, 0, 1, 1], [], []>} : vector<16x32xbf16>, vector<32x128xbf16>, vector<16x128xf32> -> vector<16x128xf32>
      %59 = arith.truncf %58 : vector<16x128xf32> to vector<16x128xbf16>
      %c0_29 = arith.constant 0 : index
      %c0_30 = arith.constant 0 : index
      %60 = vector.load %arg7[%c0_29, %c0_30] : memref<16x128xbf16, #tpu.memory_space<vmem>>, vector<16x128xbf16>
      tpu.vector_store %arg7[%c0_29, %c0_30], %59 {strides = array<i32>} : memref<16x128xbf16, #tpu.memory_space<vmem>>, vector<16x128xbf16>,
    } else {
    }
    %c0 = arith.constant 0 : index
    %c0_1 = arith.constant 0 : index
    %c0_2 = arith.constant 0 : index
    %3 = vector.load %arg2[%c0, %c0_1, %c0_2] : memref<1x16x32xbf16, #tpu.memory_space<vmem>>, vector<1x16x32xbf16>
    %4 = vector.shape_cast %3 : vector<1x16x32xbf16> to vector<16x32xbf16>
    %c0_3 = arith.constant 0 : index
    %c0_4 = arith.constant 0 : index
    %5 = vector.load %arg4[%c0_3, %c0_4] : memref<32x384xbf16, #tpu.memory_space<vmem>>, vector<32x128xbf16>
    %cst = arith.constant dense<0.000000e+00> : vector<16x128xf32>
    %6 = tpu.matmul %4, %5, %cst {dimension_numbers = #tpu.dot_dimension_numbers<[1], [0], [0], [1], [0, 0, 1, 1], [], []>} : vector<16x32xbf16>, vector<32x128xbf16>, vector<16x128xf32> -> vector<16x128xf32>
    %cst_5 = arith.constant 2.500000e-01 : f32
    %7 = vector.broadcast %cst_5 : f32 to vector<16x128xf32>
    %8 = arith.mulf %6, %7 : vector<16x128xf32>
    %9 = arith.truncf %8 : vector<16x128xf32> to vector<16x128xbf16>
    %cst_6 = arith.constant 0xFF800000 : f32
    %10 = vector.broadcast %cst_6 : f32 to vector<16x1xf32>
    %cst_7 = arith.constant 0.000000e+00 : f32
    %11 = vector.broadcast %cst_7 : f32 to vector<16x1xf32>
    %cst_8 = arith.constant 0.000000e+00 : f32
    %12 = vector.broadcast %cst_8 : f32 to vector<16x128xf32>
    %c0_i32_9 = arith.constant 0 : i32
    %13 = arith.subi %arg1, %c0_i32_9 : i32
    %14 = arith.addi %c0_i32_9, %13 : i32
    %c1_i32 = arith.constant 1 : i32
    %15:3 = scf.for %arg8 = %c0_i32_9 to %14 step %c1_i32 iter_args(%arg9 = %10, %arg10 = %11, %arg11 = %12) -> (vector<16x1xf32>, vector<16x1xf32>, vector<16x128xf32>)  : i32 {
      %c16_i32_20 = arith.constant 16 : i32
      %51 = arith.muli %arg8, %c16_i32_20 : i32
      %52 = tpu.assume_multiple %51, 16 : i32
      %53 = arith.index_cast %52 : i32 to index
      %c0_21 = arith.constant 0 : index
      %54 = vector.load %arg6[%53, %c0_21] : memref<16x128xbf16, #tpu.memory_space<vmem>>, vector<16x128xbf16>
      %55 = arith.index_cast %52 : i32 to index
      %c0_22 = arith.constant 0 : index
      %56 = vector.load %arg7[%55, %c0_22] : memref<16x128xbf16, #tpu.memory_space<vmem>>, vector<16x128xbf16>
      %cst_23 = arith.constant dense<0.000000e+00> : vector<16x16xf32>
      %57 = tpu.matmul %9, %54, %cst_23 {dimension_numbers = #tpu.dot_dimension_numbers<[1], [1], [0], [0], [0, 0, 1, 0], [], []>} : vector<16x128xbf16>, vector<16x128xbf16>, vector<16x16xf32> -> vector<16x16xf32>
      %cst_24 = arith.constant dense<0xFF800000> : vector<16xf32>
      %58 = vector.multi_reduction <maximumf>, %57, %cst_24 [1] : vector<16x16xf32> to vector<16xf32>
      %59 = vector.shape_cast %58 : vector<16xf32> to vector<16x1xf32>
      %60 = arith.maximumf %arg9, %59 : vector<16x1xf32>
      %61 = arith.subf %arg9, %60 : vector<16x1xf32>
      %62 = math.exp %61 : vector<16x1xf32>
      %63 = vector.broadcast %60 : vector<16x1xf32> to vector<16x16xf32>
      %64 = arith.subf %57, %63 : vector<16x16xf32>
      %65 = math.exp %64 : vector<16x16xf32>
      %66 = arith.mulf %62, %arg10 : vector<16x1xf32>
      %cst_25 = arith.constant dense<0.000000e+00> : vector<16xf32>
      %67 = vector.multi_reduction <add>, %65, %cst_25 [1] : vector<16x16xf32> to vector<16xf32>
      %68 = vector.shape_cast %67 : vector<16xf32> to vector<16x1xf32>
      %69 = arith.addf %66, %68 : vector<16x1xf32>
      %70 = vector.broadcast %62 : vector<16x1xf32> to vector<16x128xf32>
      %71 = arith.mulf %70, %arg11 : vector<16x128xf32>
      %72 = arith.truncf %65 : vector<16x16xf32> to vector<16x16xbf16>
      %cst_26 = arith.constant dense<0.000000e+00> : vector<16x128xf32>
      %73 = tpu.matmul %72, %56, %cst_26 {dimension_numbers = #tpu.dot_dimension_numbers<[1], [0], [0], [1], [0, 0, 1, 1], [], []>} : vector<16x16xbf16>, vector<16x128xbf16>, vector<16x128xf32> -> vector<16x128xf32>
      %74 = arith.addf %71, %73 : vector<16x128xf32>
      scf.yield %60, %69, %74 : vector<16x1xf32>, vector<16x1xf32>, vector<16x128xf32>
    }
    %c16_i32 = arith.constant 16 : i32
    %16 = arith.muli %arg1, %c16_i32 : i32
    %17 = tpu.assume_multiple %16, 16 : i32
    %18 = arith.index_cast %17 : i32 to index
    %c0_10 = arith.constant 0 : index
    %19 = vector.load %arg6[%18, %c0_10] : memref<16x128xbf16, #tpu.memory_space<vmem>>, vector<16x128xbf16>
    %20 = arith.index_cast %17 : i32 to index
    %c0_11 = arith.constant 0 : index
    %21 = vector.load %arg7[%20, %c0_11] : memref<16x128xbf16, #tpu.memory_space<vmem>>, vector<16x128xbf16>
    %cst_12 = arith.constant dense<0.000000e+00> : vector<16x16xf32>
    %22 = tpu.matmul %9, %19, %cst_12 {dimension_numbers = #tpu.dot_dimension_numbers<[1], [1], [0], [0], [0, 0, 1, 0], [], []>} : vector<16x128xbf16>, vector<16x128xbf16>, vector<16x16xf32> -> vector<16x16xf32>
    %23 = tpu.iota {dimensions = array<i32: 0>} : vector<16x16xi32>
    %24 = tpu.iota {dimensions = array<i32: 1>} : vector<16x16xi32>
    %25 = arith.cmpi sgt, %24, %23 : vector<16x16xi32>
    %cst_13 = arith.constant -1.000000e+30 : f32
    %26 = vector.broadcast %cst_13 : f32 to vector<16x16xf32>
    %27 = arith.select %25, %26, %22 : vector<16x16xi1>, vector<16x16xf32>
    %cst_14 = arith.constant dense<0xFF800000> : vector<16xf32>
    %28 = vector.multi_reduction <maximumf>, %27, %cst_14 [1] : vector<16x16xf32> to vector<16xf32>
    %29 = vector.shape_cast %28 : vector<16xf32> to vector<16x1xf32>
    %30 = arith.maximumf %15#0, %29 : vector<16x1xf32>
    %31 = arith.subf %15#0, %30 : vector<16x1xf32>
    %32 = math.exp %31 : vector<16x1xf32>
    %33 = vector.broadcast %30 : vector<16x1xf32> to vector<16x16xf32>
    %34 = arith.subf %27, %33 : vector<16x16xf32>
    %35 = math.exp %34 : vector<16x16xf32>
    %36 = arith.mulf %32, %15#1 : vector<16x1xf32>
    %cst_15 = arith.constant dense<0.000000e+00> : vector<16xf32>
    %37 = vector.multi_reduction <add>, %35, %cst_15 [1] : vector<16x16xf32> to vector<16xf32>
    %38 = vector.shape_cast %37 : vector<16xf32> to vector<16x1xf32>
    %39 = arith.addf %36, %38 : vector<16x1xf32>
    %40 = vector.broadcast %32 : vector<16x1xf32> to vector<16x128xf32>
    %41 = arith.mulf %40, %15#2 : vector<16x128xf32>
    %42 = arith.truncf %35 : vector<16x16xf32> to vector<16x16xbf16>
    %cst_16 = arith.constant dense<0.000000e+00> : vector<16x128xf32>
    %43 = tpu.matmul %42, %21, %cst_16 {dimension_numbers = #tpu.dot_dimension_numbers<[1], [0], [0], [1], [0, 0, 1, 1], [], []>} : vector<16x16xbf16>, vector<16x128xbf16>, vector<16x128xf32> -> vector<16x128xf32>
    %44 = arith.addf %41, %43 : vector<16x128xf32>
    %45 = tpu.reciprocal %39 {approx = true} : vector<16x1xf32> -> vector<16x1xf32>
    %46 = vector.broadcast %45 : vector<16x1xf32> to vector<16x128xf32>
    %47 = arith.mulf %44, %46 : vector<16x128xf32>
    %c0_17 = arith.constant 0 : index
    %c0_18 = arith.constant 0 : index
    %c0_19 = arith.constant 0 : index
    %48 = vector.load %arg5[%c0_17, %c0_18, %c0_19] : memref<1x16x128xf32, #tpu.memory_space<vmem>>, vector<1x16x128xf32>
    %49 = vector.shape_cast %48 : vector<1x16x128xf32> to vector<16x128xf32>
    %50 = vector.shape_cast %47 : vector<16x128xf32> to vector<1x16x128xf32>
    tpu.vector_store %arg5[%c0_17, %c0_18, %c0_19], %50 {strides = array<i32>} : memref<1x16x128xf32, #tpu.memory_space<vmem>>, vector<1x16x128xf32>,
    return
  }
  func.func @transform_0(%arg0: i32, %arg1: i32) -> (i32, i32, i32) {
    %c0_i32 = arith.constant 0 : i32
    %c0_i32_0 = arith.constant 0 : i32
    return %arg0, %arg1, %c0_i32 : i32, i32, i32
  }
  func.func @transform_1(%arg0: i32, %arg1: i32) -> (i32, i32, i32) {
    %c0_i32 = arith.constant 0 : i32
    %c0_i32_0 = arith.constant 0 : i32
    %c0_i32_1 = arith.constant 0 : i32
    return %arg0, %c0_i32, %c0_i32_0 : i32, i32, i32
  }
  func.func @transform_2(%arg0: i32, %arg1: i32) -> (i32, i32) {
    %c0_i32 = arith.constant 0 : i32
    %c0_i32_0 = arith.constant 0 : i32
    %c0_i32_1 = arith.constant 0 : i32
    return %c0_i32, %c0_i32_0 : i32, i32
  }
  func.func @transform_3(%arg0: i32, %arg1: i32) -> (i32, i32, i32) {
    %c0_i32 = arith.constant 0 : i32
    %c0_i32_0 = arith.constant 0 : i32
    return %arg0, %arg1, %c0_i32 : i32, i32, i32
  }
}

</mosaic_0001>

<llo_original>
// kernel: causal_attention_v2.1
$region0: #{causal_attention_v2.1}
  #allocation0 [shape = 'u32[]', space=smem, size = 0x4, offset = 0x4, fixed_abs, tag = 'smem constant byte address 0x4 - core index']
  #allocation1 [shape = 'u32[144,128]{1,0:T(1,128)}', space=vmem, size = 0x12000, scoped, tag = 'internal scratch']
  #allocation2 [shape = 'bf16[16,128]{1,0:T(16,128)(2,1)}', space=vmem, size = 0x1000, scoped, tag = 'scratch operand']
  #allocation3 [shape = 'bf16[16,128]{1,0:T(16,128)(2,1)}', space=vmem, size = 0x1000, scoped, tag = 'scratch operand']
  %s0 = inlined_call_operand.vmem [shape: bf16[2,16,32], index: 0, kind: input, shape index: {}, may-alias: {0,1}]
  %s1 = inlined_call_operand.vmem [shape: bf16[2,16,32], index: 1, kind: input, shape index: {}, may-alias: {0,1}]
  %s2 = inlined_call_operand.vmem [shape: bf16[32,384], index: 2, kind: input, shape index: {}]
  %s3 = inlined_call_operand.vmem [shape: f32[2,16,128], index: 3, kind: output, shape index: {}]
  %s4 = sld [smem:[#allocation0]]
  $region56: #{causal_attention_v2.1} parent=0
    _
  %s6 = ssub.s32 1, %s4
  %s7 = scalar_select 0, %s6, %s4
  loop: start=0, step=1, limit=4
  $region2: #{causal_attention_v2.1} parent=0 // loop_pre_header
    _
  $region3: #{causal_attention_v2.1} parent=0 // loop_header
    %s9 = sphi 0, %s13
    %p10 = scmp.ge.s32.totalorder %s9, 4
    %s16 = sphi 0, %s28
    %s17 = sphi 0, %s24
    %s18 = sphi 0, %s16
    %s19 = sphi 0, %s17
    %s20 = sphi 0, %s18
    %s21 = sphi 0, %s19
    %s33 = sphi 0, %s35
    %s36 = sphi 0, %s33
    %s37 = sphi 0, %s36
    %s53 = sphi 0, %s37
    %s59 = sphi 0, %s61
    %s62 = sphi 0, %s59
    %s63 = sphi 0, %s62
    %s79 = sphi 0, %s63
    %s83 = sphi 0, %s83
    %s85 = sphi 0, %s83
    %s86 = sphi 0, %s85
    %s100 = sphi 0, %s86
    %s108 = sphi 0, %s110
    %s111 = sphi 0, %s108
    %s112 = sphi 0, %s111
    %s128 = sphi 0, %s112
  $region4: #{causal_attention_v2.1} parent=0 // loop_header_branch
    %12 = sbr.rel (%p10) target = $region8
  $region5: #{causal_attention_v2.1} parent=0 // loop_body
    %s14 = ssub.s32 %s9, 1
    %s15 = ssub.s32 %s9, 2
    %s22 = sadd.s32 1, %s17
    %p23 = scmp.ge.s32.totalorder %s22, 1
    %s24 = scalar_select %p23, 0, %s22
    %s25 = sadd.s32 1, %s16
    %s26 = scalar_select %p23, %s25, %s16
    %p27 = scmp.ge.s32.totalorder %s26, 2
    %s28 = scalar_select %p27, 0, %s26
    %s29 = ssub.s32 %s16, %s28
    %s30 = ssub.s32 %s17, %s24
    %s31 = sor.u32 %s29, %s30
    %p32 = scmp.eq.s32.totalorder %s31, 0
    %s34 = sadd.s32 %s33, 1
    %s35 = scalar_select %p32, %s33, %s34
    %p38 = pneg %p32
    %p39 = scmp.eq.s32.totalorder %s9, 1
    %p40 = por %p38, %p39
    %p41 = scmp.ne.s32.totalorder %s33, %s36
    %p42 = scmp.eq.s32.totalorder %s9, 0
    %p43 = por %p41, %p42
    %p44 = scmp.ne.s32.totalorder %s33, %s36
    %p45 = scmp.eq.s32.totalorder %s14, 1
    %p46 = por %p44, %p45
    %p47 = scmp.ne.s32.totalorder %s36, %s37
    %p48 = scmp.eq.s32.totalorder %s14, 0
    %p49 = por %p47, %p48
    %p50 = scmp.ne.s32.totalorder %s36, %s37
    %p51 = scmp.eq.s32.totalorder %s15, 1
    %p52 = por %p50, %p51
    %p54 = scmp.ne.s32.totalorder %s37, %s53
    %p55 = scmp.eq.s32.totalorder %s15, 0
    %p56 = por %p54, %p55
    %s57 = ssub.s32 %s16, %s28
    %p58 = scmp.eq.s32.totalorder %s57, 0
    %s60 = sadd.s32 %s59, 1
    %s61 = scalar_select %p58, %s59, %s60
    %p64 = pneg %p58
    %p65 = scmp.eq.s32.totalorder %s9, 1
    %p66 = por %p64, %p65
    %p67 = scmp.ne.s32.totalorder %s59, %s62
    %p68 = scmp.eq.s32.totalorder %s9, 0
    %p69 = por %p67, %p68
    %p70 = scmp.ne.s32.totalorder %s59, %s62
    %p71 = scmp.eq.s32.totalorder %s14, 1
    %p72 = por %p70, %p71
    %p73 = scmp.ne.s32.totalorder %s62, %s63
    %p74 = scmp.eq.s32.totalorder %s14, 0
    %p75 = por %p73, %p74
    %p76 = scmp.ne.s32.totalorder %s62, %s63
    %p77 = scmp.eq.s32.totalorder %s15, 1
    %p78 = por %p76, %p77
    %p80 = scmp.ne.s32.totalorder %s63, %s79
    %p81 = scmp.eq.s32.totalorder %s15, 0
    %p82 = por %p80, %p81
    %s84 = sadd.s32 %s83, 1
    %p87 = scmp.eq.s32.totalorder %s9, 1
    %p88 = scmp.ne.s32.totalorder %s83, %s85
    %p89 = scmp.eq.s32.totalorder %s9, 0
    %p90 = por %p88, %p89
    %p91 = scmp.ne.s32.totalorder %s83, %s85
    %p92 = scmp.eq.s32.totalorder %s14, 1
    %p93 = por %p91, %p92
    %p94 = scmp.ne.s32.totalorder %s85, %s86
    %p95 = scmp.eq.s32.totalorder %s14, 0
    %p96 = por %p94, %p95
    %p97 = scmp.ne.s32.totalorder %s85, %s86
    %p98 = scmp.eq.s32.totalorder %s15, 1
    %p99 = por %p97, %p98
    %p101 = scmp.ne.s32.totalorder %s86, %s100
    %p102 = scmp.eq.s32.totalorder %s15, 0
    %p103 = por %p101, %p102
    %s104 = ssub.s32 %s16, %s28
    %s105 = ssub.s32 %s17, %s24
    %s106 = sor.u32 %s104, %s105
    %p107 = scmp.eq.s32.totalorder %s106, 0
    %s109 = sadd.s32 %s108, 1
    %s110 = scalar_select %p107, %s108, %s109
    %p113 = pneg %p107
    %p114 = scmp.eq.s32.totalorder %s9, 1
    %p115 = por %p113, %p114
    %p116 = scmp.ne.s32.totalorder %s108, %s111
    %p117 = scmp.eq.s32.totalorder %s9, 0
    %p118 = por %p116, %p117
    %p119 = scmp.ne.s32.totalorder %s108, %s111
    %p120 = scmp.eq.s32.totalorder %s14, 1
    %p121 = por %p119, %p120
    %p122 = scmp.ne.s32.totalorder %s111, %s112
    %p123 = scmp.eq.s32.totalorder %s14, 0
    %p124 = por %p122, %p123
    %p125 = scmp.ne.s32.totalorder %s111, %s112
    %p126 = scmp.eq.s32.totalorder %s15, 1
    %p127 = por %p125, %p126
    %p129 = scmp.ne.s32.totalorder %s112, %s128
    %p130 = scmp.eq.s32.totalorder %s15, 0
    %p131 = por %p129, %p130
    %p132 = scmp.le.s32.totalorder 1, %s9
    %p133 = scmp.lt.s32.totalorder %s9, 3
    %p134 = pnand %p132, %p133
    %p135 = pneg %p134
    // Predicated region
    $region9: #{causal_attention_v2.1} parent=5 // pred_check
      _
    $region10: #{causal_attention_v2.1} parent=5 // pred_check_branch
      %137 = sbr.rel (%p134) target = $region12
    $region11: #{causal_attention_v2.1} parent=5 // pred_region
      %s138 = ssub.s32 %s9, 1
      // Predicated region
      $region13: #{causal_attention_v2.1} parent=11 // pred_check
        %p139 = pneg %p96
      $region14: #{causal_attention_v2.1} parent=11 // pred_check_branch
        %141 = sbr.rel (%p139) target = $region16
      $region15: #{causal_attention_v2.1} parent=11 // pred_region
        _
      $region16: #{causal_attention_v2.1} parent=11 // pred_fallthru
        _
    $region12: #{causal_attention_v2.1} parent=5 // pred_fallthru
      _
    %p142 = scmp.lt.s32.totalorder %s9, 2
    // Predicated region
    $region17: #{causal_attention_v2.1} parent=5 // pred_check
      %p143 = pneg %p142
    $region18: #{causal_attention_v2.1} parent=5 // pred_check_branch
      %145 = sbr.rel (%p143) target = $region20
    $region19: #{causal_attention_v2.1} parent=5 // pred_region
      // Predicated region
      $region21: #{causal_attention_v2.1} parent=19 // pred_check
        %p146 = pneg %p43
      $region22: #{causal_attention_v2.1} parent=19 // pred_check_branch
        %148 = sbr.rel (%p146) target = $region24
      $region23: #{causal_attention_v2.1} parent=19 // pred_region
        %s149 = smul.u32 2, %s17
        %p150 = scmp.lt.s32.totalorder %s16, 1
        %s151 = scalar_select %p150, %s16, 1
        %p152 = scmp.lt.s32.totalorder %s149, 1
        %s153 = scalar_select %p152, %s149, 1
        %s154 = smul.addr %s151, 2
        %s155 = sadd.s32 %s153, %s154
        %s156 = smul.addr %s155, 4
        %s157 = scalar_lea.vmem %s0, %s156
        %s158 = smul.u32 2, %s17
      $region24: #{causal_attention_v2.1} parent=19 // pred_fallthru
        _
      // Predicated region
      $region25: #{causal_attention_v2.1} parent=19 // pred_check
        %p159 = pneg %p69
      $region26: #{causal_attention_v2.1} parent=19 // pred_check_branch
        %161 = sbr.rel (%p159) target = $region28
      $region27: #{causal_attention_v2.1} parent=19 // pred_region
        %p162 = scmp.lt.s32.totalorder %s16, 1
        %s163 = scalar_select %p162, %s16, 1
        %s164 = smul.addr %s163, 2
        %s165 = smul.addr %s164, 4
        %s166 = scalar_lea.vmem %s1, %s165
      $region28: #{causal_attention_v2.1} parent=19 // pred_fallthru
        _
    $region20: #{causal_attention_v2.1} parent=5 // pred_fallthru
      _
    %p167 = scmp.le.s32.totalorder 1, %s9
    %p168 = scmp.lt.s32.totalorder %s9, 3
    %p169 = pnand %p167, %p168
    %p170 = pneg %p169
    // Predicated region
    $region29: #{causal_attention_v2.1} parent=5 // pred_check
      _
    $region30: #{causal_attention_v2.1} parent=5 // pred_check_branch
      %172 = sbr.rel (%p169) target = $region32
    $region31: #{causal_attention_v2.1} parent=5 // pred_region
      %s173 = ssub.s32 %s9, 1
      %s174 = smul.u32 2, %s19
      %p175 = scmp.lt.s32.totalorder %s18, 1
      %s176 = scalar_select %p175, %s18, 1
      %p177 = scmp.lt.s32.totalorder %s174, 1
      %s178 = scalar_select %p177, %s174, 1
      %s179 = smul.addr %s176, 2
      %s180 = sadd.s32 %s178, %s179
      %s181 = smul.addr %s180, 4
      %s182 = scalar_lea.vmem %s0, %s181
      %p183 = pneg %p49
      %p184 = pneg %p46
      %p185 = scmp.lt.s32.totalorder %s18, 1
      %s186 = scalar_select %p185, %s18, 1
      %s187 = smul.addr %s186, 2
      %s188 = smul.addr %s187, 4
      %s189 = scalar_lea.vmem %s1, %s188
      %p190 = pneg %p75
      %p191 = pneg %p72
      %p192 = pneg %p96
      %p193 = pneg %p93
      %p194 = pneg %p124
      %p195 = pneg %p121
      %s196 = smul.u32 2, %s19
      %p197 = scmp.lt.s32.totalorder %s18, 1
      %s198 = scalar_select %p197, %s18, 1
      %p199 = scmp.lt.s32.totalorder %s196, 1
      %s200 = scalar_select %p199, %s196, 1
      %s201 = smul.addr %s198, 2
      %s202 = sadd.s32 %s200, %s201
      %s203 = smul.addr %s202, 8
      %s204 = scalar_lea.vmem %s3, %s203
      %s205 = smul.u32 2, %s19
      %p206 = scmp.lt.s32.totalorder %s18, 1
      %s207 = scalar_select %p206, %s18, 1
      %p208 = scmp.lt.s32.totalorder %s205, 1
      %s209 = scalar_select %p208, %s205, 1
      %s210 = smul.addr %s207, 2
      %s211 = sadd.s32 %s209, %s210
      %s212 = smul.addr %s211, 4
      %s213 = scalar_lea.vmem %s0, %s212
      %s214 = smul.u32 2, %s19
      %p215 = scmp.lt.s32.totalorder %s18, 1
      %s216 = scalar_select %p215, %s18, 1
      %s217 = smul.addr %s216, 2
      %s218 = smul.addr %s217, 4
      %s219 = scalar_lea.vmem %s1, %s218
      %s220 = smul.u32 2, %s19
      %p221 = scmp.lt.s32.totalorder %s18, 1
      %s222 = scalar_select %p221, %s18, 1
      %p223 = scmp.lt.s32.totalorder %s220, 1
      %s224 = scalar_select %p223, %s220, 1
      %s225 = smul.addr %s222, 2
      %s226 = sadd.s32 %s224, %s225
      %s227 = smul.addr %s226, 8
      %s228 = scalar_lea.vmem %s3, %s227
      %s229 = smul.u32 2, %s19
      %p231 = scmp.eq.s32.totalorder %s19, 0
      // Predicated region
      $region33: #{causal_attention_v2.1} parent=31 // pred_check
        %p232 = pneg %p231
      $region34: #{causal_attention_v2.1} parent=31 // pred_check_branch
        %234 = sbr.rel (%p232) target = $region36
      $region35: #{causal_attention_v2.1} parent=31 // pred_region
        %v235 = vld [vmem:[%s219] sm:$0xf]
        %v236 = vld [vmem:[%s219 + $0x4] sm:$0xf]
        %v237 = vld [vmem:[%s2 + $0x4] sm:$0xf]
        %v238 = vld [vmem:[%s2 + $0x10] sm:$0xf]
        %v239 = vld [vmem:[%s2 + $0x1c] sm:$0xf]
        %v240 = vld [vmem:[%s2 + $0x28] sm:$0xf]
        %v241 = vld [vmem:[%s2 + $0x8] sm:$0xf]
        %v242 = vld [vmem:[%s2 + $0x14] sm:$0xf]
        %v243 = vld [vmem:[%s2 + $0x20] sm:$0xf]
        %v244 = vld [vmem:[%s2 + $0x2c] sm:$0xf]
        %v247 = vunpack.c.l.b16 %v235
        %v248 = vunpack.c.l.b16 %v236
        %v249 = vpack.c.b16 %v248, %v247
        %v254 = vunpack.c.l.b16 %v237
        %v255 = vunpack.c.l.b16 %v238
        %v256 = vunpack.c.l.b16 %v239
        %v257 = vunpack.c.l.b16 %v240
        %v258 = vpack.c.b16 %v255, %v254
        %v259 = vpack.c.b16 %v257, %v256
        %vm262 = vcmask 261120
        %v264 = vsel %vm262, %v249, 0
        %266 = vmatprep.subr.bf16.mxu0 0
        %267 = vmatpush1.bf16.msra.mxu0 %v258
        %268 = vmatprep.subr.bf16.mxu0 0
        %269 = vmatpush1.bf16.msra.mxu0 %v259
        %270 = vmatprep.subr.bf16.mxu0 0
        %271 = vmatpush1.bf16.msra.mxu0 0
        %272 = vmatprep.subr.bf16.mxu0 0
        %273 = vmatpush1.bf16.msra.mxu0 0
        %274 = vmatprep.subr.bf16.mxu0 0
        %275 = vmatpush1.bf16.msra.mxu0 0
        %276 = vmatprep.subr.bf16.mxu0 0
        %277 = vmatpush1.bf16.msra.mxu0 0
        %278 = vmatprep.subr.bf16.mxu0 0
        %279 = vmatpush1.bf16.msra.mxu0 0
        %280 = vmatprep.subr.bf16.mxu0 0
        %281 = vmatpush1.bf16.msra.mxu0 0
        %282 = vmatprep.subr.bf16.mxu0 0
        %283 = vmatpush1.bf16.msra.mxu0 0
        %284 = vmatprep.subr.bf16.mxu0 0
        %285 = vmatpush1.bf16.msra.mxu0 0
        %286 = vmatprep.subr.bf16.mxu0 0
        %287 = vmatpush1.bf16.msra.mxu0 0
        %288 = vmatprep.subr.bf16.mxu0 0
        %289 = vmatpush1.bf16.msra.mxu0 0
        %290 = vmatprep.subr.bf16.mxu0 0
        %291 = vmatpush1.bf16.msra.mxu0 0
        %292 = vmatprep.subr.bf16.mxu0 0
        %293 = vmatpush1.bf16.msra.mxu0 0
        %294 = vmatprep.subr.bf16.mxu0 0
        %295 = vmatpush1.bf16.msra.mxu0 0
        %296 = vmatprep.subr.bf16.mxu0 0
        %297 = vmatpush1.bf16.msra.mxu0 0
        %298 = vmatprep.mubr.bf16.mxu0 0
        %299 = vmatmul.mubr.bf16.gmra.mrb[0].mxu0 %v264
        %v300 = vpop.f32.mrb[0].mxu0
        %v301 = vadd.f32 0.0, %v300
        %v302 = vpop.f32.mrb[0].mxu0
        %v303 = vpop.f32.mrb[0].mxu0
        %v304 = vadd.f32 0.0, %v303
        %v305 = vpop.f32.mrb[0].mxu0
        %306 = vdwg.mxu0
        %v307 = vpack.c.bf16 %v304, %v301
        %308 = vst [vmem:[#allocation2] sm:$0xff] %v307
        %v313 = vunpack.c.l.b16 %v241
        %v314 = vunpack.c.l.b16 %v242
        %v315 = vunpack.c.l.b16 %v243
        %v316 = vunpack.c.l.b16 %v244
        %v317 = vpack.c.b16 %v314, %v313
        %v318 = vpack.c.b16 %v316, %v315
        %321 = vmatprep.subr.bf16.mxu0 0
        %322 = vmatpush1.bf16.msra.mxu0 %v317
        %323 = vmatprep.subr.bf16.mxu0 0
        %324 = vmatpush1.bf16.msra.mxu0 %v318
        %325 = vmatprep.subr.bf16.mxu0 0
        %326 = vmatpush1.bf16.msra.mxu0 0
        %327 = vmatprep.subr.bf16.mxu0 0
        %328 = vmatpush1.bf16.msra.mxu0 0
        %329 = vmatprep.subr.bf16.mxu0 0
        %330 = vmatpush1.bf16.msra.mxu0 0
        %331 = vmatprep.subr.bf16.mxu0 0
        %332 = vmatpush1.bf16.msra.mxu0 0
        %333 = vmatprep.subr.bf16.mxu0 0
        %334 = vmatpush1.bf16.msra.mxu0 0
        %335 = vmatprep.subr.bf16.mxu0 0
        %336 = vmatpush1.bf16.msra.mxu0 0
        %337 = vmatprep.subr.bf16.mxu0 0
        %338 = vmatpush1.bf16.msra.mxu0 0
        %339 = vmatprep.subr.bf16.mxu0 0
        %340 = vmatpush1.bf16.msra.mxu0 0
        %341 = vmatprep.subr.bf16.mxu0 0
        %342 = vmatpush1.bf16.msra.mxu0 0
        %343 = vmatprep.subr.bf16.mxu0 0
        %344 = vmatpush1.bf16.msra.mxu0 0
        %345 = vmatprep.subr.bf16.mxu0 0
        %346 = vmatpush1.bf16.msra.mxu0 0
        %347 = vmatprep.subr.bf16.mxu0 0
        %348 = vmatpush1.bf16.msra.mxu0 0
        %349 = vmatprep.subr.bf16.mxu0 0
        %350 = vmatpush1.bf16.msra.mxu0 0
        %351 = vmatprep.subr.bf16.mxu0 0
        %352 = vmatpush1.bf16.msra.mxu0 0
        %353 = vmatprep.mubr.bf16.mxu0 0
        %354 = vmatmul.mubr.bf16.gmra.mrb[0].mxu0 %v264
        %v355 = vpop.f32.mrb[0].mxu0
        %v356 = vadd.f32 0.0, %v355
        %v357 = vpop.f32.mrb[0].mxu0
        %v358 = vpop.f32.mrb[0].mxu0
        %v359 = vadd.f32 0.0, %v358
        %v360 = vpop.f32.mrb[0].mxu0
        %361 = vdwg.mxu0
        %v362 = vpack.c.bf16 %v359, %v356
        %363 = vst [vmem:[#allocation3] sm:$0xff] %v362
      $region36: #{causal_attention_v2.1} parent=31 // pred_fallthru
        _
      %v364 = vld [vmem:[%s213] sm:$0xf]
      %v365 = vld [vmem:[%s213 + $0x4] sm:$0xf]
      %v366 = vld [vmem:[%s2] sm:$0xf]
      %v367 = vld [vmem:[%s2 + $0xc] sm:$0xf]
      %v368 = vld [vmem:[%s2 + $0x18] sm:$0xf]
      %v369 = vld [vmem:[%s2 + $0x24] sm:$0xf]
      %v372 = vunpack.c.l.b16 %v364
      %v373 = vunpack.c.l.b16 %v365
      %v374 = vpack.c.b16 %v373, %v372
      %v379 = vunpack.c.l.b16 %v366
      %v380 = vunpack.c.l.b16 %v367
      %v381 = vunpack.c.l.b16 %v368
      %v382 = vunpack.c.l.b16 %v369
      %v383 = vpack.c.b16 %v380, %v379
      %v384 = vpack.c.b16 %v382, %v381
      %vm387 = vcmask 261120
      %v389 = vsel %vm387, %v374, 0
      %391 = vmatprep.subr.bf16.mxu0 0
      %392 = vmatpush1.bf16.msra.mxu0 %v383
      %393 = vmatprep.subr.bf16.mxu0 0
      %394 = vmatpush1.bf16.msra.mxu0 %v384
      %395 = vmatprep.subr.bf16.mxu0 0
      %396 = vmatpush1.bf16.msra.mxu0 0
      %397 = vmatprep.subr.bf16.mxu0 0
      %398 = vmatpush1.bf16.msra.mxu0 0
      %399 = vmatprep.subr.bf16.mxu0 0
      %400 = vmatpush1.bf16.msra.mxu0 0
      %401 = vmatprep.subr.bf16.mxu0 0
      %402 = vmatpush1.bf16.msra.mxu0 0
      %403 = vmatprep.subr.bf16.mxu0 0
      %404 = vmatpush1.bf16.msra.mxu0 0
      %405 = vmatprep.subr.bf16.mxu0 0
      %406 = vmatpush1.bf16.msra.mxu0 0
      %407 = vmatprep.subr.bf16.mxu0 0
      %408 = vmatpush1.bf16.msra.mxu0 0
      %409 = vmatprep.subr.bf16.mxu0 0
      %410 = vmatpush1.bf16.msra.mxu0 0
      %411 = vmatprep.subr.bf16.mxu0 0
      %412 = vmatpush1.bf16.msra.mxu0 0
      %413 = vmatprep.subr.bf16.mxu0 0
      %414 = vmatpush1.bf16.msra.mxu0 0
      %415 = vmatprep.subr.bf16.mxu0 0
      %416 = vmatpush1.bf16.msra.mxu0 0
      %417 = vmatprep.subr.bf16.mxu0 0
      %418 = vmatpush1.bf16.msra.mxu0 0
      %419 = vmatprep.subr.bf16.mxu0 0
      %420 = vmatpush1.bf16.msra.mxu0 0
      %421 = vmatprep.subr.bf16.mxu0 0
      %422 = vmatpush1.bf16.msra.mxu0 0
      %423 = vmatprep.mubr.bf16.mxu0 0
      %424 = vmatmul.mubr.bf16.gmra.mrb[0].mxu0 %v389
      %v425 = vpop.f32.mrb[0].mxu0
      %v426 = vadd.f32 0.0, %v425
      %v427 = vpop.f32.mrb[0].mxu0
      %v428 = vpop.f32.mrb[0].mxu0
      %v429 = vadd.f32 0.0, %v428
      %v430 = vpop.f32.mrb[0].mxu0
      %431 = vdwg.mxu0
      %v432 = vmul.f32 %v426, 0.25
      %v433 = vmul.f32 %v429, 0.25
      %v434 = vpack.c.bf16 %v433, %v432
      // While loop
      $region37: #{causal_attention_v2.1} parent=31 // loop_pre_header
        _
      $region38: #{causal_attention_v2.1} parent=31 // loop_header
        %s436 = sphi 0, %s438
        %p437 = scmp.ge.s32.totalorder %s436, %s19
        %v441 = vphi -inf, %v504
        %v442 = vphi -inf, %v505
        %v443 = vphi 0.0, %v526
        %v444 = vphi 0.0, %v527
        %v445 = vphi 0.0, %v575
        %v446 = vphi 0.0, %v576
      $region39: #{causal_attention_v2.1} parent=31 // loop_header_branch
        %440 = sbr.rel (%p437) target = $region43
      $region40: #{causal_attention_v2.1} parent=31 // loop_body
        %s447 = smul.u32 %s436, 16
        %s448 = sshra.s32 %s447, 4
        %s449 = sand.u32 %s447, 15
        %s450 = smul.addr %s448, 8
        %s451 = scalar_lea.vmem [#allocation2], %s450
        %v452 = vld [vmem:[%s451] sm:$0xff]
        %s453 = smul.addr %s448, 8
        %s454 = scalar_lea.vmem [#allocation3], %s453
        %v455 = vld [vmem:[%s454] sm:$0xff]
        %456 = vmatprep.subr.bf16.mxu0 0
        %457 = vmatpush1.bf16.xpose.msra.mxu0 %v452
        %458 = vmatprep.subr.bf16.mxu0 0
        %459 = vmatpush1.bf16.xpose.msra.mxu0 0
        %460 = vmatprep.subr.bf16.mxu0 0
        %461 = vmatpush1.bf16.xpose.msra.mxu0 0
        %462 = vmatprep.subr.bf16.mxu0 0
        %463 = vmatpush1.bf16.xpose.msra.mxu0 0
        %464 = vmatprep.subr.bf16.mxu0 0
        %465 = vmatpush1.bf16.xpose.msra.mxu0 0
        %466 = vmatprep.subr.bf16.mxu0 0
        %467 = vmatpush1.bf16.xpose.msra.mxu0 0
        %468 = vmatprep.subr.bf16.mxu0 0
        %469 = vmatpush1.bf16.xpose.msra.mxu0 0
        %470 = vmatprep.subr.bf16.mxu0 0
        %471 = vmatpush1.bf16.xpose.msra.mxu0 0
        %472 = vmatprep.subr.bf16.mxu0 0
        %473 = vmatpush1.bf16.xpose.msra.mxu0 0
        %474 = vmatprep.subr.bf16.mxu0 0
        %475 = vmatpush1.bf16.xpose.msra.mxu0 0
        %476 = vmatprep.subr.bf16.mxu0 0
        %477 = vmatpush1.bf16.xpose.msra.mxu0 0
        %478 = vmatprep.subr.bf16.mxu0 0
        %479 = vmatpush1.bf16.xpose.msra.mxu0 0
        %480 = vmatprep.subr.bf16.mxu0 0
        %481 = vmatpush1.bf16.xpose.msra.mxu0 0
        %482 = vmatprep.subr.bf16.mxu0 0
        %483 = vmatpush1.bf16.xpose.msra.mxu0 0
        %484 = vmatprep.subr.bf16.mxu0 0
        %485 = vmatpush1.bf16.xpose.msra.mxu0 0
        %486 = vmatprep.subr.bf16.mxu0 0
        %487 = vmatpush1.bf16.xpose.msra.mxu0 0
        %488 = vmatprep.mubr.bf16.mxu0 0
        %489 = vmatmul.mubr.bf16.gmra.mrb[0].mxu0 %v434
        %v490 = vpop.f32.mrb[0].mxu0
        %v491 = vadd.f32 0.0, %v490
        %v492 = vpop.f32.mrb[0].mxu0
        %v493 = vpop.f32.mrb[0].mxu0
        %v494 = vadd.f32 0.0, %v493
        %v495 = vpop.f32.mrb[0].mxu0
        %496 = vdwg.mxu0
        %vm497 = vcmask 130048
        %v498 = vsel %vm497, %v491, -inf
        %499 = vmax.xlane.f32.xlu0 %v498
        %v500 = vpop.xlane.xlu0 %499
        %v501 = vsel %vm497, %v494, -inf
        %502 = vmax.xlane.f32.xlu0 %v501
        %v503 = vpop.xlane.xlu0 %502
        %v504 = vmax.f32 %v441, %v500
        %v505 = vmax.f32 %v442, %v503
        %v506 = vsub.f32 %v441, %v504
        %v507 = vsub.f32 %v442, %v505
        %v508 = vmul.f32 %v506, 1.442695
        %v509 = vpow.pop %v508
        %v510 = vmul.f32 %v507, 1.442695
        %v511 = vpow.pop %v510
        %v512 = vsub.f32 %v491, %v504
        %v513 = vsub.f32 %v494, %v505
        %v514 = vmul.f32 %v512, 1.442695
        %v515 = vpow.pop %v514
        %v516 = vmul.f32 %v513, 1.442695
        %v517 = vpow.pop %v516
        %v518 = vmul.f32 %v509, %v443
        %v519 = vmul.f32 %v511, %v444
        %v520 = vsel %vm497, %v515, 0.0
        %521 = vadd.xlane.f32.xlu0 %v520
        %v522 = vpop.xlane.xlu0 %521
        %v523 = vsel %vm497, %v517, 0.0
        %524 = vadd.xlane.f32.xlu0 %v523
        %v525 = vpop.xlane.xlu0 %524
        %v526 = vadd.f32 %v518, %v522
        %v527 = vadd.f32 %v519, %v525
        %v528 = vmul.f32 %v509, %v445
        %v529 = vmul.f32 %v511, %v446
        %v530 = vpack.c.bf16 %v517, %v515
        %v532 = vsel %vm497, %v530, 0
        %534 = vmatprep.subr.bf16.mxu0 0
        %535 = vmatpush1.bf16.msra.mxu0 %v455
        %536 = vmatprep.subr.bf16.mxu0 0
        %537 = vmatpush1.bf16.msra.mxu0 0
        %538 = vmatprep.subr.bf16.mxu0 0
        %539 = vmatpush1.bf16.msra.mxu0 0
        %540 = vmatprep.subr.bf16.mxu0 0
        %541 = vmatpush1.bf16.msra.mxu0 0
        %542 = vmatprep.subr.bf16.mxu0 0
        %543 = vmatpush1.bf16.msra.mxu0 0
        %544 = vmatprep.subr.bf16.mxu0 0
        %545 = vmatpush1.bf16.msra.mxu0 0
        %546 = vmatprep.subr.bf16.mxu0 0
        %547 = vmatpush1.bf16.msra.mxu0 0
        %548 = vmatprep.subr.bf16.mxu0 0
        %549 = vmatpush1.bf16.msra.mxu0 0
        %550 = vmatprep.subr.bf16.mxu0 0
        %551 = vmatpush1.bf16.msra.mxu0 0
        %552 = vmatprep.subr.bf16.mxu0 0
        %553 = vmatpush1.bf16.msra.mxu0 0
        %554 = vmatprep.subr.bf16.mxu0 0
        %555 = vmatpush1.bf16.msra.mxu0 0
        %556 = vmatprep.subr.bf16.mxu0 0
        %557 = vmatpush1.bf16.msra.mxu0 0
        %558 = vmatprep.subr.bf16.mxu0 0
        %559 = vmatpush1.bf16.msra.mxu0 0
        %560 = vmatprep.subr.bf16.mxu0 0
        %561 = vmatpush1.bf16.msra.mxu0 0
        %562 = vmatprep.subr.bf16.mxu0 0
        %563 = vmatpush1.bf16.msra.mxu0 0
        %564 = vmatprep.subr.bf16.mxu0 0
        %565 = vmatpush1.bf16.msra.mxu0 0
        %566 = vmatprep.mubr.bf16.mxu0 0
        %567 = vmatmul.mubr.bf16.gmra.mrb[0].mxu0 %v532
        %v568 = vpop.f32.mrb[0].mxu0
        %v569 = vadd.f32 0.0, %v568
        %v570 = vpop.f32.mrb[0].mxu0
        %v571 = vpop.f32.mrb[0].mxu0
        %v572 = vadd.f32 0.0, %v571
        %v573 = vpop.f32.mrb[0].mxu0
        %574 = vdwg.mxu0
        %v575 = vadd.f32 %v528, %v569
        %v576 = vadd.f32 %v529, %v572
      $region41: #{causal_attention_v2.1} parent=31 // loop_footer
        %s438 = sadd.s32 %s436, 1
      $region42: #{causal_attention_v2.1} parent=31 // loop_footer_branch
        %435 = sbr.rel target = $region38
      $region43: #{causal_attention_v2.1} parent=31 // loop_exit
        _
      %s577 = smul.u32 %s19, 16
      %s578 = sshra.s32 %s577, 4
      %s579 = sand.u32 %s577, 15
      %s580 = smul.addr %s578, 8
      %s581 = scalar_lea.vmem [#allocation2], %s580
      %v582 = vld [vmem:[%s581] sm:$0xff]
      %s583 = smul.addr %s578, 8
      %s584 = scalar_lea.vmem [#allocation3], %s583
      %v585 = vld [vmem:[%s584] sm:$0xff]
      %586 = vmatprep.subr.bf16.mxu0 0
      %587 = vmatpush1.bf16.xpose.msra.mxu0 %v582
      %588 = vmatprep.subr.bf16.mxu0 0
      %589 = vmatpush1.bf16.xpose.msra.mxu0 0
      %590 = vmatprep.subr.bf16.mxu0 0
      %591 = vmatpush1.bf16.xpose.msra.mxu0 0
      %592 = vmatprep.subr.bf16.mxu0 0
      %593 = vmatpush1.bf16.xpose.msra.mxu0 0
      %594 = vmatprep.subr.bf16.mxu0 0
      %595 = vmatpush1.bf16.xpose.msra.mxu0 0
      %596 = vmatprep.subr.bf16.mxu0 0
      %597 = vmatpush1.bf16.xpose.msra.mxu0 0
      %598 = vmatprep.subr.bf16.mxu0 0
      %599 = vmatpush1.bf16.xpose.msra.mxu0 0
      %600 = vmatprep.subr.bf16.mxu0 0
      %601 = vmatpush1.bf16.xpose.msra.mxu0 0
      %602 = vmatprep.subr.bf16.mxu0 0
      %603 = vmatpush1.bf16.xpose.msra.mxu0 0
      %604 = vmatprep.subr.bf16.mxu0 0
      %605 = vmatpush1.bf16.xpose.msra.mxu0 0
      %606 = vmatprep.subr.bf16.mxu0 0
      %607 = vmatpush1.bf16.xpose.msra.mxu0 0
      %608 = vmatprep.subr.bf16.mxu0 0
      %609 = vmatpush1.bf16.xpose.msra.mxu0 0
      %610 = vmatprep.subr.bf16.mxu0 0
      %611 = vmatpush1.bf16.xpose.msra.mxu0 0
      %612 = vmatprep.subr.bf16.mxu0 0
      %613 = vmatpush1.bf16.xpose.msra.mxu0 0
      %614 = vmatprep.subr.bf16.mxu0 0
      %615 = vmatpush1.bf16.xpose.msra.mxu0 0
      %616 = vmatprep.subr.bf16.mxu0 0
      %617 = vmatpush1.bf16.xpose.msra.mxu0 0
      %618 = vmatprep.mubr.bf16.mxu0 0
      %619 = vmatmul.mubr.bf16.gmra.mrb[0].mxu0 %v434
      %v620 = vpop.f32.mrb[0].mxu0
      %v621 = vadd.f32 0.0, %v620
      %v622 = vpop.f32.mrb[0].mxu0
      %v623 = vpop.f32.mrb[0].mxu0
      %v624 = vadd.f32 0.0, %v623
      %v625 = vpop.f32.mrb[0].mxu0
      %626 = vdwg.mxu0
      %v627 = vlaneseq
      %v628 = vshrl.u32 %v627, 7
      %v629 = vadd.s32 %v628, 8
      %v630 = vlaneseq
      %v631 = vand.u32 %v630, 127
      %vm632 = vcmp.gt.s32.totalorder %v631, %v628
      %vm633 = vcmp.gt.s32.totalorder %v631, %v629
      %v634 = vsel %vm632, -1e+30, %v621
      %v635 = vsel %vm633, -1e+30, %v624
      %vm636 = vcmask 130048
      %v637 = vsel %vm636, %v634, -inf
      %638 = vmax.xlane.f32.xlu0 %v637
      %v639 = vpop.xlane.xlu0 %638
      %v640 = vsel %vm636, %v635, -inf
      %641 = vmax.xlane.f32.xlu0 %v640
      %v642 = vpop.xlane.xlu0 %641
      %v643 = vmax.f32 %v441, %v639
      %v644 = vmax.f32 %v442, %v642
      %v645 = vsub.f32 %v441, %v643
      %v646 = vsub.f32 %v442, %v644
      %v647 = vmul.f32 %v645, 1.442695
      %v648 = vpow.pop %v647
      %v649 = vmul.f32 %v646, 1.442695
      %v650 = vpow.pop %v649
      %v651 = vsub.f32 %v634, %v643
      %v652 = vsub.f32 %v635, %v644
      %v653 = vmul.f32 %v651, 1.442695
      %v654 = vpow.pop %v653
      %v655 = vmul.f32 %v652, 1.442695
      %v656 = vpow.pop %v655
      %v657 = vmul.f32 %v648, %v443
      %v658 = vmul.f32 %v650, %v444
      %v659 = vsel %vm636, %v654, 0.0
      %660 = vadd.xlane.f32.xlu0 %v659
      %v661 = vpop.xlane.xlu0 %660
      %v662 = vsel %vm636, %v656, 0.0
      %663 = vadd.xlane.f32.xlu0 %v662
      %v664 = vpop.xlane.xlu0 %663
      %v665 = vadd.f32 %v657, %v661
      %v666 = vadd.f32 %v658, %v664
      %v667 = vmul.f32 %v648, %v445
      %v668 = vmul.f32 %v650, %v446
      %v669 = vpack.c.bf16 %v656, %v654
      %v671 = vsel %vm636, %v669, 0
      %673 = vmatprep.subr.bf16.mxu0 0
      %674 = vmatpush1.bf16.msra.mxu0 %v585
      %675 = vmatprep.subr.bf16.mxu0 0
      %676 = vmatpush1.bf16.msra.mxu0 0
      %677 = vmatprep.subr.bf16.mxu0 0
      %678 = vmatpush1.bf16.msra.mxu0 0
      %679 = vmatprep.subr.bf16.mxu0 0
      %680 = vmatpush1.bf16.msra.mxu0 0
      %681 = vmatprep.subr.bf16.mxu0 0
      %682 = vmatpush1.bf16.msra.mxu0 0
      %683 = vmatprep.subr.bf16.mxu0 0
      %684 = vmatpush1.bf16.msra.mxu0 0
      %685 = vmatprep.subr.bf16.mxu0 0
      %686 = vmatpush1.bf16.msra.mxu0 0
      %687 = vmatprep.subr.bf16.mxu0 0
      %688 = vmatpush1.bf16.msra.mxu0 0
      %689 = vmatprep.subr.bf16.mxu0 0
      %690 = vmatpush1.bf16.msra.mxu0 0
      %691 = vmatprep.subr.bf16.mxu0 0
      %692 = vmatpush1.bf16.msra.mxu0 0
      %693 = vmatprep.subr.bf16.mxu0 0
      %694 = vmatpush1.bf16.msra.mxu0 0
      %695 = vmatprep.subr.bf16.mxu0 0
      %696 = vmatpush1.bf16.msra.mxu0 0
      %697 = vmatprep.subr.bf16.mxu0 0
      %698 = vmatpush1.bf16.msra.mxu0 0
      %699 = vmatprep.subr.bf16.mxu0 0
      %700 = vmatpush1.bf16.msra.mxu0 0
      %701 = vmatprep.subr.bf16.mxu0 0
      %702 = vmatpush1.bf16.msra.mxu0 0
      %703 = vmatprep.subr.bf16.mxu0 0
      %704 = vmatpush1.bf16.msra.mxu0 0
      %705 = vmatprep.mubr.bf16.mxu0 0
      %706 = vmatmul.mubr.bf16.gmra.mrb[0].mxu0 %v671
      %v707 = vpop.f32.mrb[0].mxu0
      %v708 = vadd.f32 0.0, %v707
      %v709 = vpop.f32.mrb[0].mxu0
      %v710 = vpop.f32.mrb[0].mxu0
      %v711 = vadd.f32 0.0, %v710
      %v712 = vpop.f32.mrb[0].mxu0
      %713 = vdwg.mxu0
      %v714 = vadd.f32 %v667, %v708
      %v715 = vadd.f32 %v668, %v711
      %v716 = vrcp.pop %v665
      %v717 = vrcp.pop %v666
      %v718 = vmul.f32 %v714, %v716
      %v719 = vmul.f32 %v715, %v717
      %720 = vst [vmem:[%s228] sm:$0xff] %v718
      %721 = vst [vmem:[%s228 + $0x8] sm:$0xff] %v719
      %s722 = smul.u32 2, %s19
      %p723 = scmp.lt.s32.totalorder %s18, 1
      %s724 = scalar_select %p723, %s18, 1
      %p725 = scmp.lt.s32.totalorder %s722, 1
      %s726 = scalar_select %p725, %s722, 1
      %s727 = smul.addr %s724, 2
      %s728 = sadd.s32 %s726, %s727
      %s729 = smul.addr %s728, 8
      %s730 = scalar_lea.vmem %s3, %s729
      // Predicated region
      $region44: #{causal_attention_v2.1} parent=31 // pred_check
        %p731 = pneg %p121
      $region45: #{causal_attention_v2.1} parent=31 // pred_check_branch
        %733 = sbr.rel (%p731) target = $region47
      $region46: #{causal_attention_v2.1} parent=31 // pred_region
        %s734 = smul.u32 2, %s19
      $region47: #{causal_attention_v2.1} parent=31 // pred_fallthru
        _
    $region32: #{causal_attention_v2.1} parent=5 // pred_fallthru
      _
    %p735 = scmp.le.s32.totalorder 2, %s9
    // Predicated region
    $region48: #{causal_attention_v2.1} parent=5 // pred_check
      %p736 = pneg %p735
    $region49: #{causal_attention_v2.1} parent=5 // pred_check_branch
      %738 = sbr.rel (%p736) target = $region51
    $region50: #{causal_attention_v2.1} parent=5 // pred_region
      %s739 = ssub.s32 %s9, 2
      // Predicated region
      $region52: #{causal_attention_v2.1} parent=50 // pred_check
        %p740 = pneg %p127
      $region53: #{causal_attention_v2.1} parent=50 // pred_check_branch
        %742 = sbr.rel (%p740) target = $region55
      $region54: #{causal_attention_v2.1} parent=50 // pred_region
        %s743 = smul.u32 2, %s21
        %p744 = scmp.lt.s32.totalorder %s20, 1
        %s745 = scalar_select %p744, %s20, 1
        %p746 = scmp.lt.s32.totalorder %s743, 1
        %s747 = scalar_select %p746, %s743, 1
        %s748 = smul.addr %s745, 2
        %s749 = sadd.s32 %s747, %s748
        %s750 = smul.addr %s749, 8
        %s751 = scalar_lea.vmem %s3, %s750
      $region55: #{causal_attention_v2.1} parent=50 // pred_fallthru
        _
    $region51: #{causal_attention_v2.1} parent=5 // pred_fallthru
      _
  $region6: #{causal_attention_v2.1} parent=0 // loop_footer
    %s13 = sadd.s32 1, %s9
  $region7: #{causal_attention_v2.1} parent=0 // loop_footer_branch
    %8 = sbr.rel target = $region3
  $region8: #{causal_attention_v2.1} parent=0 // loop_exit
    _

</llo_original>
